<compile_context>
chip_gen: v7x
topology: tpu7x:2x2x1
jax: 0.10.0
libtpu: 0.0.40
codegen_flags: <defaults>
</compile_context>

<pallas_src>
import numpy as np
import jax
import jax.numpy as jnp
from jax import lax
from jax.experimental import pallas as pl
from jax.experimental.pallas import tpu as pltpu


_LN_EPS = 1e-5          # torch.nn.LayerNorm default
_L2_EPS_SQ = 1e-24      # (F.normalize eps 1e-12) ** 2
_MAX_BATCH_TILE = 512   # fits v7x's 64 MiB VMEM comfortably
_VMEM_LIMIT = 48 * 1024 * 1024   # above default scoped limits, below v7x phys


def _round_up(x, m):
    return ((x + m - 1) // m) * m


def _encoder_branch(x_ref, w_ref, p_ref, o_ref):
    """Linear -> LayerNorm -> ReLU -> (Dropout=identity) -> L2-normalize."""
    # bf16 MXU matmul with f32 accumulation; everything after stays f32.
    x = x_ref[...].astype(jnp.bfloat16)
    h = jnp.dot(x, w_ref[...], preferred_element_type=jnp.float32)

    p = p_ref[...]                      # (3, E) f32: [bias; gamma; beta]
    h = h + p[0:1, :]

    e = h.shape[-1]
    inv_e = jnp.float32(1.0 / e)
    mean = jnp.sum(h, axis=-1, keepdims=True) * inv_e
    cen = h - mean
    var = jnp.sum(cen * cen, axis=-1, keepdims=True) * inv_e   # biased (torch)
    hn = cen * lax.rsqrt(var + _LN_EPS)
    hn = hn * p[1:2, :] + p[2:3, :]
    hn = jnp.maximum(hn, 0.0)

    # TODO(synk): Dropout(p=0.3) is identity in eval mode; training-mode
    # masking (pltpu.prng_seed / prng_random_bits) not implemented.

    # F.normalize(dim=-1): x / max(||x||, 1e-12) == x * rsqrt(max(ss, 1e-24))
    ss = jnp.sum(hn * hn, axis=-1, keepdims=True)
    o_ref[...] = (hn * lax.rsqrt(jnp.maximum(ss, _L2_EPS_SQ))).astype(o_ref.dtype)


def _clip_kernel(eeg_ref, txt_ref, ew_ref, ep_ref, tw_ref, tp_ref,
                 eeg_out_ref, txt_out_ref):
    # TODO(synk): for small batches on v7x (grid degenerates to 1 step) the two
    # branches could be split onto a leading size-2 "parallel" grid axis so
    # both TensorCores get work; here they run back-to-back in one body.
    _encoder_branch(eeg_ref, ew_ref, ep_ref, eeg_out_ref)
    _encoder_branch(txt_ref, tw_ref, tp_ref, txt_out_ref)


def _forward(use_buffered_params, eeg, text, ew, eparams, tw, tparams,
             logit_scale):
    B = eeg.shape[0]
    eeg_dim = eeg.shape[1]
    text_dim = text.shape[1]
    embed_dim = ew.shape[1]

    # Batch tile: as large as reasonable (kernel is HBM-/overhead-bound),
    # sublane-aligned, capped for v7x's 64 MiB VMEM.
    tm = min(_MAX_BATCH_TILE, _round_up(B, 8))
    grid = (pl.cdiv(B, tm),)

    def resident(shape):
        # Parameters never change across the batch grid; single-buffer them.
        if use_buffered_params:
            return pl.BlockSpec(shape, lambda i: (0, 0),
                                pipeline_mode=pl.Buffered(1))
        return pl.BlockSpec(shape, lambda i: (0, 0))

    # TODO(synk): for very large eeg_dim/text_dim the fully resident (K, E)
    # weights should move to a trailing "arbitrary" K-reduction grid axis with
    # a VMEM accumulator and a pl.when-gated epilogue.
    eeg_out, txt_out = pl.pallas_call(
        _clip_kernel,
        out_shape=(jax.ShapeDtypeStruct((B, embed_dim), jnp.float32),
                   jax.ShapeDtypeStruct((B, embed_dim), jnp.float32)),
        grid=grid,
        in_specs=[
            pl.BlockSpec((tm, eeg_dim), lambda i: (i, 0)),    # eeg activations
            pl.BlockSpec((tm, text_dim), lambda i: (i, 0)),   # text activations
            resident((eeg_dim, embed_dim)),                   # eeg W   (bf16)
            resident((3, embed_dim)),                         # eeg b/gamma/beta
            resident((text_dim, embed_dim)),                  # text W  (bf16)
            resident((3, embed_dim)),                         # text b/gamma/beta
        ],
        out_specs=(pl.BlockSpec((tm, embed_dim), lambda i: (i, 0)),
                   pl.BlockSpec((tm, embed_dim), lambda i: (i, 0))),
        compiler_params=pltpu.CompilerParams(
            dimension_semantics=("parallel",),
            vmem_limit_bytes=_VMEM_LIMIT),
    )(eeg, text, ew, eparams, tw, tparams)

    scale = jnp.exp(jnp.minimum(logit_scale, jnp.float32(np.log(100.0))))
    return eeg_out, txt_out, scale


_forward_jit = jax.jit(_forward, static_argnums=(0,))


class EEGTextCLIPPallas:
    """JAX/Pallas re-implementation of EEGTextCLIP (inference semantics)."""

    def __init__(self, eeg_dim, text_dim, embed_dim, key):
        self.eeg_dim, self.text_dim, self.embed_dim = eeg_dim, text_dim, embed_dim
        k1, k2, k3, k4 = jax.random.split(key, 4)
        ew = jax.random.normal(k1, (eeg_dim, embed_dim), jnp.float32) * 0.02
        tw = jax.random.normal(k2, (text_dim, embed_dim), jnp.float32) * 0.02
        eb = jax.random.normal(k3, (embed_dim,), jnp.float32) * 0.02
        tb = jax.random.normal(k4, (embed_dim,), jnp.float32) * 0.02

        # Weights stored bf16 (halves HBM + resident VMEM); LN affine params
        # and bias stay f32, packed [bias; gamma; beta] per branch.
        self.ew = ew.astype(jnp.bfloat16)
        self.tw = tw.astype(jnp.bfloat16)
        ones = jnp.ones((embed_dim,), jnp.float32)
        zeros = jnp.zeros((embed_dim,), jnp.float32)
        self.eparams = jnp.stack([eb, ones, zeros])   # (3, E)
        self.tparams = jnp.stack([tb, ones, zeros])   # (3, E)

        self.logit_scale = jnp.asarray(np.log(1.0 / 0.07), jnp.float32)
        self._use_buffered = True

    def __call__(self, eeg, text):
        args = (eeg, text, self.ew, self.eparams, self.tw, self.tparams,
                self.logit_scale)
        if self._use_buffered:
            try:
                out = _forward_jit(True, *args)
                jax.block_until_ready(out)
                return out
            except Exception:
                # pipeline_mode=pl.Buffered(1) rejected by this JAX/Mosaic
                # build; fall back to default double-buffered resident params.
                self._use_buffered = False
        return _forward_jit(False, *args)


def _ref_encoder(x, w_bf16, bias, gamma, beta):
    """Pure-JAX reference with identical numerics (bf16 matmul, f32 epilogue)."""
    h = jnp.dot(x.astype(jnp.bfloat16), w_bf16,
                preferred_element_type=jnp.float32) + bias
    mean = jnp.mean(h, axis=-1, keepdims=True)
    var = jnp.mean((h - mean) ** 2, axis=-1, keepdims=True)
    h = (h - mean) * lax.rsqrt(var + _LN_EPS)
    h = h * gamma + beta
    h = jnp.maximum(h, 0.0)
    ss = jnp.sum(h * h, axis=-1, keepdims=True)
    return h * lax.rsqrt(jnp.maximum(ss, _L2_EPS_SQ))


if __name__ == "__main__":
    B, EEG_DIM, TEXT_DIM, EMBED_DIM = 8, 32, 48, 32

    key = jax.random.PRNGKey(0)
    k_eeg, k_txt, k_params = jax.random.split(key, 3)
    eeg = jax.random.normal(k_eeg, (B, EEG_DIM), jnp.float32)
    text = jax.random.normal(k_txt, (B, TEXT_DIM), jnp.float32)

    model = EEGTextCLIPPallas(EEG_DIM, TEXT_DIM, EMBED_DIM, k_params)
    eeg_embeds, text_embeds, scale = model(eeg, text)
    jax.block_until_ready((eeg_embeds, text_embeds, scale))

    # Correctness vs pure-JAX reference of the same module semantics.
    ref_eeg = _ref_encoder(eeg, model.ew, model.eparams[0],
                           model.eparams[1], model.eparams[2])
    ref_txt = _ref_encoder(text, model.tw, model.tparams[0],
                           model.tparams[1], model.tparams[2])
    assert eeg_embeds.shape == (B, EMBED_DIM)
    assert text_embeds.shape == (B, EMBED_DIM)
    assert np.allclose(np.asarray(eeg_embeds), np.asarray(ref_eeg),
                       rtol=1e-3, atol=1e-4)
    assert np.allclose(np.asarray(text_embeds), np.asarray(ref_txt),
                       rtol=1e-3, atol=1e-4)
    assert np.allclose(float(scale), 1.0 / 0.07, rtol=1e-5)

    print("KERNEL_OK")
</pallas_src>

<mosaic_0001>
module attributes {stable_mosaic.version = 11 : i64} {
  func.func @_clip_kernel(%arg0: i32, %arg1: memref<8x32xf32, #tpu.memory_space<vmem>>, %arg2: memref<8x48xf32, #tpu.memory_space<vmem>>, %arg3: memref<32x32xbf16, #tpu.memory_space<vmem>>, %arg4: memref<3x32xf32, #tpu.memory_space<vmem>>, %arg5: memref<48x32xbf16, #tpu.memory_space<vmem>>, %arg6: memref<3x32xf32, #tpu.memory_space<vmem>>, %arg7: memref<8x32xf32, #tpu.memory_space<vmem>>, %arg8: memref<8x32xf32, #tpu.memory_space<vmem>>) attributes {dimension_semantics = [#tpu.dimension_semantics<parallel>], iteration_bounds = array<i64: 1>, scalar_prefetch = 0 : i64, scratch_operands = 0 : i64, tpu.core_type = #tpu.core_type<tc>, window_params = [{transform_indices = @transform_0, window_bounds = array<i64: 8, 32>}, {transform_indices = @transform_1, window_bounds = array<i64: 8, 48>}, {pipeline_mode = #tpu.pipeline_mode<synchronous>, transform_indices = @transform_2, window_bounds = array<i64: 32, 32>}, {pipeline_mode = #tpu.pipeline_mode<synchronous>, transform_indices = @transform_3, window_bounds = array<i64: 3, 32>}, {pipeline_mode = #tpu.pipeline_mode<synchronous>, transform_indices = @transform_4, window_bounds = array<i64: 48, 32>}, {pipeline_mode = #tpu.pipeline_mode<synchronous>, transform_indices = @transform_5, window_bounds = array<i64: 3, 32>}, {transform_indices = @transform_6, window_bounds = array<i64: 8, 32>}, {transform_indices = @transform_7, window_bounds = array<i64: 8, 32>}]} {
    %c0 = arith.constant 0 : index
    %c0_0 = arith.constant 0 : index
    %0 = vector.load %arg1[%c0, %c0_0] : memref<8x32xf32, #tpu.memory_space<vmem>>, vector<8x32xf32>
    %1 = arith.truncf %0 : vector<8x32xf32> to vector<8x32xbf16>
    %c0_1 = arith.constant 0 : index
    %c0_2 = arith.constant 0 : index
    %2 = vector.load %arg3[%c0_1, %c0_2] : memref<32x32xbf16, #tpu.memory_space<vmem>>, vector<32x32xbf16>
    %cst = arith.constant dense<0.000000e+00> : vector<8x32xf32>
    %3 = tpu.matmul %1, %2, %cst {dimension_numbers = #tpu.dot_dimension_numbers<[1], [0], [0], [1], [0, 0, 1, 1], [], []>} : vector<8x32xbf16>, vector<32x32xbf16>, vector<8x32xf32> -> vector<8x32xf32>
    %c0_3 = arith.constant 0 : index
    %c0_4 = arith.constant 0 : index
    %4 = vector.load %arg4[%c0_3, %c0_4] : memref<3x32xf32, #tpu.memory_space<vmem>>, vector<3x32xf32>
    %5 = vector.extract_strided_slice %4 {offsets = [0, 0], sizes = [1, 32], strides = [1, 1]} : vector<3x32xf32> to vector<1x32xf32>
    %6 = vector.broadcast %5 : vector<1x32xf32> to vector<8x32xf32>
    %7 = arith.addf %3, %6 : vector<8x32xf32>
    %cst_5 = arith.constant dense<0.000000e+00> : vector<8xf32>
    %8 = vector.multi_reduction <add>, %7, %cst_5 [1] : vector<8x32xf32> to vector<8xf32>
    %9 = vector.shape_cast %8 : vector<8xf32> to vector<8x1xf32>
    %cst_6 = arith.constant 3.125000e-02 : f32
    %10 = vector.broadcast %cst_6 : f32 to vector<8x1xf32>
    %11 = arith.mulf %9, %10 : vector<8x1xf32>
    %12 = vector.broadcast %11 : vector<8x1xf32> to vector<8x32xf32>
    %13 = arith.subf %7, %12 : vector<8x32xf32>
    %14 = arith.mulf %13, %13 : vector<8x32xf32>
    %cst_7 = arith.constant dense<0.000000e+00> : vector<8xf32>
    %15 = vector.multi_reduction <add>, %14, %cst_7 [1] : vector<8x32xf32> to vector<8xf32>
    %16 = vector.shape_cast %15 : vector<8xf32> to vector<8x1xf32>
    %cst_8 = arith.constant 3.125000e-02 : f32
    %17 = vector.broadcast %cst_8 : f32 to vector<8x1xf32>
    %18 = arith.mulf %16, %17 : vector<8x1xf32>
    %cst_9 = arith.constant 9.99999974E-6 : f32
    %19 = vector.broadcast %cst_9 : f32 to vector<8x1xf32>
    %20 = arith.addf %18, %19 : vector<8x1xf32>
    %21 = math.rsqrt %20 : vector<8x1xf32>
    %22 = vector.broadcast %21 : vector<8x1xf32> to vector<8x32xf32>
    %23 = arith.mulf %13, %22 : vector<8x32xf32>
    %24 = vector.extract_strided_slice %4 {offsets = [1, 0], sizes = [1, 32], strides = [1, 1]} : vector<3x32xf32> to vector<1x32xf32>
    %25 = vector.broadcast %24 : vector<1x32xf32> to vector<8x32xf32>
    %26 = arith.mulf %23, %25 : vector<8x32xf32>
    %27 = vector.extract_strided_slice %4 {offsets = [2, 0], sizes = [1, 32], strides = [1, 1]} : vector<3x32xf32> to vector<1x32xf32>
    %28 = vector.broadcast %27 : vector<1x32xf32> to vector<8x32xf32>
    %29 = arith.addf %26, %28 : vector<8x32xf32>
    %cst_10 = arith.constant 0.000000e+00 : f32
    %30 = vector.broadcast %cst_10 : f32 to vector<8x32xf32>
    %31 = arith.maximumf %29, %30 : vector<8x32xf32>
    %32 = arith.mulf %31, %31 : vector<8x32xf32>
    %cst_11 = arith.constant dense<0.000000e+00> : vector<8xf32>
    %33 = vector.multi_reduction <add>, %32, %cst_11 [1] : vector<8x32xf32> to vector<8xf32>
    %34 = vector.shape_cast %33 : vector<8xf32> to vector<8x1xf32>
    %cst_12 = arith.constant 1.000000e-24 : f32
    %35 = vector.broadcast %cst_12 : f32 to vector<8x1xf32>
    %36 = arith.maximumf %34, %35 : vector<8x1xf32>
    %37 = math.rsqrt %36 : vector<8x1xf32>
    %38 = vector.broadcast %37 : vector<8x1xf32> to vector<8x32xf32>
    %39 = arith.mulf %31, %38 : vector<8x32xf32>
    %c0_13 = arith.constant 0 : index
    %c0_14 = arith.constant 0 : index
    %40 = vector.load %arg7[%c0_13, %c0_14] : memref<8x32xf32, #tpu.memory_space<vmem>>, vector<8x32xf32>
    tpu.vector_store %arg7[%c0_13, %c0_14], %39 {strides = array<i32>} : memref<8x32xf32, #tpu.memory_space<vmem>>, vector<8x32xf32>,
    %c0_15 = arith.constant 0 : index
    %c0_16 = arith.constant 0 : index
    %41 = vector.load %arg2[%c0_15, %c0_16] : memref<8x48xf32, #tpu.memory_space<vmem>>, vector<8x48xf32>
    %42 = arith.truncf %41 : vector<8x48xf32> to vector<8x48xbf16>
    %c0_17 = arith.constant 0 : index
    %c0_18 = arith.constant 0 : index
    %43 = vector.load %arg5[%c0_17, %c0_18] : memref<48x32xbf16, #tpu.memory_space<vmem>>, vector<48x32xbf16>
    %cst_19 = arith.constant dense<0.000000e+00> : vector<8x32xf32>
    %44 = tpu.matmul %42, %43, %cst_19 {dimension_numbers = #tpu.dot_dimension_numbers<[1], [0], [0], [1], [0, 0, 1, 1], [], []>} : vector<8x48xbf16>, vector<48x32xbf16>, vector<8x32xf32> -> vector<8x32xf32>
    %c0_20 = arith.constant 0 : index
    %c0_21 = arith.constant 0 : index
    %45 = vector.load %arg6[%c0_20, %c0_21] : memref<3x32xf32, #tpu.memory_space<vmem>>, vector<3x32xf32>
    %46 = vector.extract_strided_slice %45 {offsets = [0, 0], sizes = [1, 32], strides = [1, 1]} : vector<3x32xf32> to vector<1x32xf32>
    %47 = vector.broadcast %46 : vector<1x32xf32> to vector<8x32xf32>
    %48 = arith.addf %44, %47 : vector<8x32xf32>
    %cst_22 = arith.constant dense<0.000000e+00> : vector<8xf32>
    %49 = vector.multi_reduction <add>, %48, %cst_22 [1] : vector<8x32xf32> to vector<8xf32>
    %50 = vector.shape_cast %49 : vector<8xf32> to vector<8x1xf32>
    %cst_23 = arith.constant 3.125000e-02 : f32
    %51 = vector.broadcast %cst_23 : f32 to vector<8x1xf32>
    %52 = arith.mulf %50, %51 : vector<8x1xf32>
    %53 = vector.broadcast %52 : vector<8x1xf32> to vector<8x32xf32>
    %54 = arith.subf %48, %53 : vector<8x32xf32>
    %55 = arith.mulf %54, %54 : vector<8x32xf32>
    %cst_24 = arith.constant dense<0.000000e+00> : vector<8xf32>
    %56 = vector.multi_reduction <add>, %55, %cst_24 [1] : vector<8x32xf32> to vector<8xf32>
    %57 = vector.shape_cast %56 : vector<8xf32> to vector<8x1xf32>
    %cst_25 = arith.constant 3.125000e-02 : f32
    %58 = vector.broadcast %cst_25 : f32 to vector<8x1xf32>
    %59 = arith.mulf %57, %58 : vector<8x1xf32>
    %cst_26 = arith.constant 9.99999974E-6 : f32
    %60 = vector.broadcast %cst_26 : f32 to vector<8x1xf32>
    %61 = arith.addf %59, %60 : vector<8x1xf32>
    %62 = math.rsqrt %61 : vector<8x1xf32>
    %63 = vector.broadcast %62 : vector<8x1xf32> to vector<8x32xf32>
    %64 = arith.mulf %54, %63 : vector<8x32xf32>
    %65 = vector.extract_strided_slice %45 {offsets = [1, 0], sizes = [1, 32], strides = [1, 1]} : vector<3x32xf32> to vector<1x32xf32>
    %66 = vector.broadcast %65 : vector<1x32xf32> to vector<8x32xf32>
    %67 = arith.mulf %64, %66 : vector<8x32xf32>
    %68 = vector.extract_strided_slice %45 {offsets = [2, 0], sizes = [1, 32], strides = [1, 1]} : vector<3x32xf32> to vector<1x32xf32>
    %69 = vector.broadcast %68 : vector<1x32xf32> to vector<8x32xf32>
    %70 = arith.addf %67, %69 : vector<8x32xf32>
    %cst_27 = arith.constant 0.000000e+00 : f32
    %71 = vector.broadcast %cst_27 : f32 to vector<8x32xf32>
    %72 = arith.maximumf %70, %71 : vector<8x32xf32>
    %73 = arith.mulf %72, %72 : vector<8x32xf32>
    %cst_28 = arith.constant dense<0.000000e+00> : vector<8xf32>
    %74 = vector.multi_reduction <add>, %73, %cst_28 [1] : vector<8x32xf32> to vector<8xf32>
    %75 = vector.shape_cast %74 : vector<8xf32> to vector<8x1xf32>
    %cst_29 = arith.constant 1.000000e-24 : f32
    %76 = vector.broadcast %cst_29 : f32 to vector<8x1xf32>
    %77 = arith.maximumf %75, %76 : vector<8x1xf32>
    %78 = math.rsqrt %77 : vector<8x1xf32>
    %79 = vector.broadcast %78 : vector<8x1xf32> to vector<8x32xf32>
    %80 = arith.mulf %72, %79 : vector<8x32xf32>
    %c0_30 = arith.constant 0 : index
    %c0_31 = arith.constant 0 : index
    %81 = vector.load %arg8[%c0_30, %c0_31] : memref<8x32xf32, #tpu.memory_space<vmem>>, vector<8x32xf32>
    tpu.vector_store %arg8[%c0_30, %c0_31], %80 {strides = array<i32>} : memref<8x32xf32, #tpu.memory_space<vmem>>, vector<8x32xf32>,
    return
  }
  func.func @transform_0(%arg0: i32) -> (i32, i32) {
    %c0_i32 = arith.constant 0 : i32
    %c0_i32_0 = arith.constant 0 : i32
    return %arg0, %c0_i32 : i32, i32
  }
  func.func @transform_1(%arg0: i32) -> (i32, i32) {
    %c0_i32 = arith.constant 0 : i32
    %c0_i32_0 = arith.constant 0 : i32
    return %arg0, %c0_i32 : i32, i32
  }
  func.func @transform_2(%arg0: i32) -> (i32, i32) {
    %c0_i32 = arith.constant 0 : i32
    %c0_i32_0 = arith.constant 0 : i32
    %c0_i32_1 = arith.constant 0 : i32
    return %c0_i32, %c0_i32_0 : i32, i32
  }
  func.func @transform_3(%arg0: i32) -> (i32, i32) {
    %c0_i32 = arith.constant 0 : i32
    %c0_i32_0 = arith.constant 0 : i32
    %c0_i32_1 = arith.constant 0 : i32
    return %c0_i32, %c0_i32_0 : i32, i32
  }
  func.func @transform_4(%arg0: i32) -> (i32, i32) {
    %c0_i32 = arith.constant 0 : i32
    %c0_i32_0 = arith.constant 0 : i32
    %c0_i32_1 = arith.constant 0 : i32
    return %c0_i32, %c0_i32_0 : i32, i32
  }
  func.func @transform_5(%arg0: i32) -> (i32, i32) {
    %c0_i32 = arith.constant 0 : i32
    %c0_i32_0 = arith.constant 0 : i32
    %c0_i32_1 = arith.constant 0 : i32
    return %c0_i32, %c0_i32_0 : i32, i32
  }
  func.func @transform_6(%arg0: i32) -> (i32, i32) {
    %c0_i32 = arith.constant 0 : i32
    %c0_i32_0 = arith.constant 0 : i32
    return %arg0, %c0_i32 : i32, i32
  }
  func.func @transform_7(%arg0: i32) -> (i32, i32) {
    %c0_i32 = arith.constant 0 : i32
    %c0_i32_0 = arith.constant 0 : i32
    return %arg0, %c0_i32 : i32, i32
  }
}

module attributes {stable_mosaic.version = 11 : i64} {
  func.func @_clip_kernel(%arg0: i32, %arg1: memref<8x32xf32, #tpu.memory_space<vmem>>, %arg2: memref<8x48xf32, #tpu.memory_space<vmem>>, %arg3: memref<32x32xbf16, #tpu.memory_space<vmem>>, %arg4: memref<3x32xf32, #tpu.memory_space<vmem>>, %arg5: memref<48x32xbf16, #tpu.memory_space<vmem>>, %arg6: memref<3x32xf32, #tpu.memory_space<vmem>>, %arg7: memref<8x32xf32, #tpu.memory_space<vmem>>, %arg8: memref<8x32xf32, #tpu.memory_space<vmem>>) attributes {dimension_semantics = [#tpu.dimension_semantics<parallel>], iteration_bounds = array<i64: 1>, scalar_prefetch = 0 : i64, scratch_operands = 0 : i64, tpu.core_type = #tpu.core_type<tc>, window_params = [{transform_indices = @transform_0, window_bounds = array<i64: 8, 32>}, {transform_indices = @transform_1, window_bounds = array<i64: 8, 48>}, {pipeline_mode = #tpu.pipeline_mode<synchronous>, transform_indices = @transform_2, window_bounds = array<i64: 32, 32>}, {pipeline_mode = #tpu.pipeline_mode<synchronous>, transform_indices = @transform_3, window_bounds = array<i64: 3, 32>}, {pipeline_mode = #tpu.pipeline_mode<synchronous>, transform_indices = @transform_4, window_bounds = array<i64: 48, 32>}, {pipeline_mode = #tpu.pipeline_mode<synchronous>, transform_indices = @transform_5, window_bounds = array<i64: 3, 32>}, {transform_indices = @transform_6, window_bounds = array<i64: 8, 32>}, {transform_indices = @transform_7, window_bounds = array<i64: 8, 32>}]} {
    %c0 = arith.constant 0 : index
    %c0_0 = arith.constant 0 : index
    %0 = vector.load %arg1[%c0, %c0_0] : memref<8x32xf32, #tpu.memory_space<vmem>>, vector<8x32xf32>
    %1 = arith.truncf %0 : vector<8x32xf32> to vector<8x32xbf16>
    %c0_1 = arith.constant 0 : index
    %c0_2 = arith.constant 0 : index
    %2 = vector.load %arg3[%c0_1, %c0_2] : memref<32x32xbf16, #tpu.memory_space<vmem>>, vector<32x32xbf16>
    %cst = arith.constant dense<0.000000e+00> : vector<8x32xf32>
    %3 = tpu.matmul %1, %2, %cst {dimension_numbers = #tpu.dot_dimension_numbers<[1], [0], [0], [1], [0, 0, 1, 1], [], []>} : vector<8x32xbf16>, vector<32x32xbf16>, vector<8x32xf32> -> vector<8x32xf32>
    %c0_3 = arith.constant 0 : index
    %c0_4 = arith.constant 0 : index
    %4 = vector.load %arg4[%c0_3, %c0_4] : memref<3x32xf32, #tpu.memory_space<vmem>>, vector<3x32xf32>
    %5 = vector.extract_strided_slice %4 {offsets = [0, 0], sizes = [1, 32], strides = [1, 1]} : vector<3x32xf32> to vector<1x32xf32>
    %6 = vector.broadcast %5 : vector<1x32xf32> to vector<8x32xf32>
    %7 = arith.addf %3, %6 : vector<8x32xf32>
    %cst_5 = arith.constant dense<0.000000e+00> : vector<8xf32>
    %8 = vector.multi_reduction <add>, %7, %cst_5 [1] : vector<8x32xf32> to vector<8xf32>
    %9 = vector.shape_cast %8 : vector<8xf32> to vector<8x1xf32>
    %cst_6 = arith.constant 3.125000e-02 : f32
    %10 = vector.broadcast %cst_6 : f32 to vector<8x1xf32>
    %11 = arith.mulf %9, %10 : vector<8x1xf32>
    %12 = vector.broadcast %11 : vector<8x1xf32> to vector<8x32xf32>
    %13 = arith.subf %7, %12 : vector<8x32xf32>
    %14 = arith.mulf %13, %13 : vector<8x32xf32>
    %cst_7 = arith.constant dense<0.000000e+00> : vector<8xf32>
    %15 = vector.multi_reduction <add>, %14, %cst_7 [1] : vector<8x32xf32> to vector<8xf32>
    %16 = vector.shape_cast %15 : vector<8xf32> to vector<8x1xf32>
    %cst_8 = arith.constant 3.125000e-02 : f32
    %17 = vector.broadcast %cst_8 : f32 to vector<8x1xf32>
    %18 = arith.mulf %16, %17 : vector<8x1xf32>
    %cst_9 = arith.constant 9.99999974E-6 : f32
    %19 = vector.broadcast %cst_9 : f32 to vector<8x1xf32>
    %20 = arith.addf %18, %19 : vector<8x1xf32>
    %21 = math.rsqrt %20 : vector<8x1xf32>
    %22 = vector.broadcast %21 : vector<8x1xf32> to vector<8x32xf32>
    %23 = arith.mulf %13, %22 : vector<8x32xf32>
    %24 = vector.extract_strided_slice %4 {offsets = [1, 0], sizes = [1, 32], strides = [1, 1]} : vector<3x32xf32> to vector<1x32xf32>
    %25 = vector.broadcast %24 : vector<1x32xf32> to vector<8x32xf32>
    %26 = arith.mulf %23, %25 : vector<8x32xf32>
    %27 = vector.extract_strided_slice %4 {offsets = [2, 0], sizes = [1, 32], strides = [1, 1]} : vector<3x32xf32> to vector<1x32xf32>
    %28 = vector.broadcast %27 : vector<1x32xf32> to vector<8x32xf32>
    %29 = arith.addf %26, %28 : vector<8x32xf32>
    %cst_10 = arith.constant 0.000000e+00 : f32
    %30 = vector.broadcast %cst_10 : f32 to vector<8x32xf32>
    %31 = arith.maximumf %29, %30 : vector<8x32xf32>
    %32 = arith.mulf %31, %31 : vector<8x32xf32>
    %cst_11 = arith.constant dense<0.000000e+00> : vector<8xf32>
    %33 = vector.multi_reduction <add>, %32, %cst_11 [1] : vector<8x32xf32> to vector<8xf32>
    %34 = vector.shape_cast %33 : vector<8xf32> to vector<8x1xf32>
    %cst_12 = arith.constant 1.000000e-24 : f32
    %35 = vector.broadcast %cst_12 : f32 to vector<8x1xf32>
    %36 = arith.maximumf %34, %35 : vector<8x1xf32>
    %37 = math.rsqrt %36 : vector<8x1xf32>
    %38 = vector.broadcast %37 : vector<8x1xf32> to vector<8x32xf32>
    %39 = arith.mulf %31, %38 : vector<8x32xf32>
    %c0_13 = arith.constant 0 : index
    %c0_14 = arith.constant 0 : index
    %40 = vector.load %arg7[%c0_13, %c0_14] : memref<8x32xf32, #tpu.memory_space<vmem>>, vector<8x32xf32>
    tpu.vector_store %arg7[%c0_13, %c0_14], %39 {strides = array<i32>} : memref<8x32xf32, #tpu.memory_space<vmem>>, vector<8x32xf32>,
    %c0_15 = arith.constant 0 : index
    %c0_16 = arith.constant 0 : index
    %41 = vector.load %arg2[%c0_15, %c0_16] : memref<8x48xf32, #tpu.memory_space<vmem>>, vector<8x48xf32>
    %42 = arith.truncf %41 : vector<8x48xf32> to vector<8x48xbf16>
    %c0_17 = arith.constant 0 : index
    %c0_18 = arith.constant 0 : index
    %43 = vector.load %arg5[%c0_17, %c0_18] : memref<48x32xbf16, #tpu.memory_space<vmem>>, vector<48x32xbf16>
    %cst_19 = arith.constant dense<0.000000e+00> : vector<8x32xf32>
    %44 = tpu.matmul %42, %43, %cst_19 {dimension_numbers = #tpu.dot_dimension_numbers<[1], [0], [0], [1], [0, 0, 1, 1], [], []>} : vector<8x48xbf16>, vector<48x32xbf16>, vector<8x32xf32> -> vector<8x32xf32>
    %c0_20 = arith.constant 0 : index
    %c0_21 = arith.constant 0 : index
    %45 = vector.load %arg6[%c0_20, %c0_21] : memref<3x32xf32, #tpu.memory_space<vmem>>, vector<3x32xf32>
    %46 = vector.extract_strided_slice %45 {offsets = [0, 0], sizes = [1, 32], strides = [1, 1]} : vector<3x32xf32> to vector<1x32xf32>
    %47 = vector.broadcast %46 : vector<1x32xf32> to vector<8x32xf32>
    %48 = arith.addf %44, %47 : vector<8x32xf32>
    %cst_22 = arith.constant dense<0.000000e+00> : vector<8xf32>
    %49 = vector.multi_reduction <add>, %48, %cst_22 [1] : vector<8x32xf32> to vector<8xf32>
    %50 = vector.shape_cast %49 : vector<8xf32> to vector<8x1xf32>
    %cst_23 = arith.constant 3.125000e-02 : f32
    %51 = vector.broadcast %cst_23 : f32 to vector<8x1xf32>
    %52 = arith.mulf %50, %51 : vector<8x1xf32>
    %53 = vector.broadcast %52 : vector<8x1xf32> to vector<8x32xf32>
    %54 = arith.subf %48, %53 : vector<8x32xf32>
    %55 = arith.mulf %54, %54 : vector<8x32xf32>
    %cst_24 = arith.constant dense<0.000000e+00> : vector<8xf32>
    %56 = vector.multi_reduction <add>, %55, %cst_24 [1] : vector<8x32xf32> to vector<8xf32>
    %57 = vector.shape_cast %56 : vector<8xf32> to vector<8x1xf32>
    %cst_25 = arith.constant 3.125000e-02 : f32
    %58 = vector.broadcast %cst_25 : f32 to vector<8x1xf32>
    %59 = arith.mulf %57, %58 : vector<8x1xf32>
    %cst_26 = arith.constant 9.99999974E-6 : f32
    %60 = vector.broadcast %cst_26 : f32 to vector<8x1xf32>
    %61 = arith.addf %59, %60 : vector<8x1xf32>
    %62 = math.rsqrt %61 : vector<8x1xf32>
    %63 = vector.broadcast %62 : vector<8x1xf32> to vector<8x32xf32>
    %64 = arith.mulf %54, %63 : vector<8x32xf32>
    %65 = vector.extract_strided_slice %45 {offsets = [1, 0], sizes = [1, 32], strides = [1, 1]} : vector<3x32xf32> to vector<1x32xf32>
    %66 = vector.broadcast %65 : vector<1x32xf32> to vector<8x32xf32>
    %67 = arith.mulf %64, %66 : vector<8x32xf32>
    %68 = vector.extract_strided_slice %45 {offsets = [2, 0], sizes = [1, 32], strides = [1, 1]} : vector<3x32xf32> to vector<1x32xf32>
    %69 = vector.broadcast %68 : vector<1x32xf32> to vector<8x32xf32>
    %70 = arith.addf %67, %69 : vector<8x32xf32>
    %cst_27 = arith.constant 0.000000e+00 : f32
    %71 = vector.broadcast %cst_27 : f32 to vector<8x32xf32>
    %72 = arith.maximumf %70, %71 : vector<8x32xf32>
    %73 = arith.mulf %72, %72 : vector<8x32xf32>
    %cst_28 = arith.constant dense<0.000000e+00> : vector<8xf32>
    %74 = vector.multi_reduction <add>, %73, %cst_28 [1] : vector<8x32xf32> to vector<8xf32>
    %75 = vector.shape_cast %74 : vector<8xf32> to vector<8x1xf32>
    %cst_29 = arith.constant 1.000000e-24 : f32
    %76 = vector.broadcast %cst_29 : f32 to vector<8x1xf32>
    %77 = arith.maximumf %75, %76 : vector<8x1xf32>
    %78 = math.rsqrt %77 : vector<8x1xf32>
    %79 = vector.broadcast %78 : vector<8x1xf32> to vector<8x32xf32>
    %80 = arith.mulf %72, %79 : vector<8x32xf32>
    %c0_30 = arith.constant 0 : index
    %c0_31 = arith.constant 0 : index
    %81 = vector.load %arg8[%c0_30, %c0_31] : memref<8x32xf32, #tpu.memory_space<vmem>>, vector<8x32xf32>
    tpu.vector_store %arg8[%c0_30, %c0_31], %80 {strides = array<i32>} : memref<8x32xf32, #tpu.memory_space<vmem>>, vector<8x32xf32>,
    return
  }
  func.func @transform_0(%arg0: i32) -> (i32, i32) {
    %c0_i32 = arith.constant 0 : i32
    %c0_i32_0 = arith.constant 0 : i32
    return %arg0, %c0_i32 : i32, i32
  }
  func.func @transform_1(%arg0: i32) -> (i32, i32) {
    %c0_i32 = arith.constant 0 : i32
    %c0_i32_0 = arith.constant 0 : i32
    return %arg0, %c0_i32 : i32, i32
  }
  func.func @transform_2(%arg0: i32) -> (i32, i32) {
    %c0_i32 = arith.constant 0 : i32
    %c0_i32_0 = arith.constant 0 : i32
    %c0_i32_1 = arith.constant 0 : i32
    return %c0_i32, %c0_i32_0 : i32, i32
  }
  func.func @transform_3(%arg0: i32) -> (i32, i32) {
    %c0_i32 = arith.constant 0 : i32
    %c0_i32_0 = arith.constant 0 : i32
    %c0_i32_1 = arith.constant 0 : i32
    return %c0_i32, %c0_i32_0 : i32, i32
  }
  func.func @transform_4(%arg0: i32) -> (i32, i32) {
    %c0_i32 = arith.constant 0 : i32
    %c0_i32_0 = arith.constant 0 : i32
    %c0_i32_1 = arith.constant 0 : i32
    return %c0_i32, %c0_i32_0 : i32, i32
  }
  func.func @transform_5(%arg0: i32) -> (i32, i32) {
    %c0_i32 = arith.constant 0 : i32
    %c0_i32_0 = arith.constant 0 : i32
    %c0_i32_1 = arith.constant 0 : i32
    return %c0_i32, %c0_i32_0 : i32, i32
  }
  func.func @transform_6(%arg0: i32) -> (i32, i32) {
    %c0_i32 = arith.constant 0 : i32
    %c0_i32_0 = arith.constant 0 : i32
    return %arg0, %c0_i32 : i32, i32
  }
  func.func @transform_7(%arg0: i32) -> (i32, i32) {
    %c0_i32 = arith.constant 0 : i32
    %c0_i32_0 = arith.constant 0 : i32
    return %arg0, %c0_i32 : i32, i32
  }
}

</mosaic_0001>

<llo_original>
// kernel: _forward.1
$region0: #{_forward.1}
  #allocation0 [shape = 'u32[]', space=smem, size = 0x4, offset = 0x4, fixed_abs, tag = 'smem constant byte address 0x4 - core index']
  #allocation1 [shape = 'u32[144,128]{1,0:T(1,128)}', space=vmem, size = 0x12000, scoped, tag = 'internal scratch']
  %s0 = inlined_call_operand.vmem [shape: f32[8,32], index: 0, kind: input, shape index: {}]
  %s1 = inlined_call_operand.vmem [shape: f32[8,48], index: 1, kind: input, shape index: {}]
  %s2 = inlined_call_operand.vmem [shape: bf16[32,32], index: 2, kind: input, shape index: {}]
  %s3 = inlined_call_operand.vmem [shape: f32[3,32], index: 3, kind: input, shape index: {}]
  %s4 = inlined_call_operand.vmem [shape: bf16[48,32], index: 4, kind: input, shape index: {}]
  %s5 = inlined_call_operand.vmem [shape: f32[3,32], index: 5, kind: input, shape index: {}]
  %s6 = inlined_call_operand.hbm [shape: f32[8,32], index: 6, kind: output, shape index: {0}]
  %s7 = inlined_call_operand.hbm [shape: f32[8,32], index: 7, kind: output, shape index: {1}]
  %8 = xla_tuple %s6, %s7
  %s9 = sld [smem:[#allocation0]]
  $region42: #{_forward.1} parent=0
    _
  %s11 = ssub.s32 1, %s9
  %s12 = scalar_select 0, %s11, %s9
  $region1: #{_forward.1} parent=0
    #allocation2 [shape = 'u8[4096]{0}', space=vmem, size = 0x1000, scoped, tag = 'output window, operand 0, single buffered']
    #allocation3 [shape = 's32[1]{0}', space=sflag, size = 0x4, scoped, tag = 'scoped memory for _forward.1']
    #allocation4 [shape = 'u8[4096]{0}', space=vmem, size = 0x1000, scoped, tag = 'output window, operand 1, single buffered']
    #allocation5 [shape = 's32[1]{0}', space=sflag, size = 0x4, scoped, tag = 'scoped memory for _forward.1']
    %13 = vsyncpa [#allocation3], 0
    %14 = vsyncpa [#allocation5], 0
    // Predicated region
    $region2: #{_forward.1} parent=1 // pred_check
      _
    $region3: #{_forward.1} parent=1 // pred_check_branch
      %16 = sbr.rel (0) target = $region5
    $region4: #{_forward.1} parent=1 // pred_region
      _
    $region5: #{_forward.1} parent=1 // pred_fallthru
      _
    // Predicated region
    $region6: #{_forward.1} parent=1 // pred_check
      _
    $region7: #{_forward.1} parent=1 // pred_check_branch
      %18 = sbr.rel (0) target = $region9
    $region8: #{_forward.1} parent=1 // pred_region
      _
    $region9: #{_forward.1} parent=1 // pred_fallthru
      _
    // Predicated region
    $region10: #{_forward.1} parent=1 // pred_check
      _
    $region11: #{_forward.1} parent=1 // pred_check_branch
      %20 = sbr.rel (0) target = $region13
    $region12: #{_forward.1} parent=1 // pred_region
      _
    $region13: #{_forward.1} parent=1 // pred_fallthru
      _
    // Predicated region
    $region14: #{_forward.1} parent=1 // pred_check
      _
    $region15: #{_forward.1} parent=1 // pred_check_branch
      %22 = sbr.rel (0) target = $region17
    $region16: #{_forward.1} parent=1 // pred_region
      _
    $region17: #{_forward.1} parent=1 // pred_fallthru
      _
    // Predicated region
    $region18: #{_forward.1} parent=1 // pred_check
      _
    $region19: #{_forward.1} parent=1 // pred_check_branch
      %24 = sbr.rel (0) target = $region21
    $region20: #{_forward.1} parent=1 // pred_region
      _
    $region21: #{_forward.1} parent=1 // pred_fallthru
      _
    // Predicated region
    $region22: #{_forward.1} parent=1 // pred_check
      _
    $region23: #{_forward.1} parent=1 // pred_check_branch
      %26 = sbr.rel (0) target = $region25
    $region24: #{_forward.1} parent=1 // pred_region
      _
    $region25: #{_forward.1} parent=1 // pred_fallthru
      _
    %v28 = vld [vmem:[%s0] sm:$0xff]
    %v29 = vpack.c.bf16 %v28, %v28
    %v30 = vld [vmem:[%s2] sm:$0xf]
    %v31 = vld [vmem:[%s2 + $0x4] sm:$0xf]
    %v32 = vld [vmem:[%s2 + $0x8] sm:$0xf]
    %v33 = vld [vmem:[%s2 + $0xc] sm:$0xf]
    %v34 = vld [vmem:[%s3] sm:$0x7]
    %v35 = vlaneseq
    %v36 = vshrl.u32 %v35, 7
    %v37 = vsub.s32 0, %v36
    %v38 = vrot.slane %v34, %v37
    %v43 = vunpack.c.l.b16 %v30
    %v44 = vunpack.c.l.b16 %v31
    %v45 = vunpack.c.l.b16 %v32
    %v46 = vunpack.c.l.b16 %v33
    %v47 = vpack.c.b16 %v44, %v43
    %v48 = vpack.c.b16 %v46, %v45
    %vm51 = vcmask 261120
    %v53 = vsel %vm51, %v29, 0
    %55 = vmatprep.subr.bf16.mxu0 0
    %56 = vmatpush1.bf16.msra.mxu0 %v47
    %57 = vmatprep.subr.bf16.mxu0 0
    %58 = vmatpush1.bf16.msra.mxu0 %v48
    %59 = vmatprep.subr.bf16.mxu0 0
    %60 = vmatpush1.bf16.msra.mxu0 0
    %61 = vmatprep.subr.bf16.mxu0 0
    %62 = vmatpush1.bf16.msra.mxu0 0
    %63 = vmatprep.subr.bf16.mxu0 0
    %64 = vmatpush1.bf16.msra.mxu0 0
    %65 = vmatprep.subr.bf16.mxu0 0
    %66 = vmatpush1.bf16.msra.mxu0 0
    %67 = vmatprep.subr.bf16.mxu0 0
    %68 = vmatpush1.bf16.msra.mxu0 0
    %69 = vmatprep.subr.bf16.mxu0 0
    %70 = vmatpush1.bf16.msra.mxu0 0
    %71 = vmatprep.subr.bf16.mxu0 0
    %72 = vmatpush1.bf16.msra.mxu0 0
    %73 = vmatprep.subr.bf16.mxu0 0
    %74 = vmatpush1.bf16.msra.mxu0 0
    %75 = vmatprep.subr.bf16.mxu0 0
    %76 = vmatpush1.bf16.msra.mxu0 0
    %77 = vmatprep.subr.bf16.mxu0 0
    %78 = vmatpush1.bf16.msra.mxu0 0
    %79 = vmatprep.subr.bf16.mxu0 0
    %80 = vmatpush1.bf16.msra.mxu0 0
    %81 = vmatprep.subr.bf16.mxu0 0
    %82 = vmatpush1.bf16.msra.mxu0 0
    %83 = vmatprep.subr.bf16.mxu0 0
    %84 = vmatpush1.bf16.msra.mxu0 0
    %85 = vmatprep.subr.bf16.mxu0 0
    %86 = vmatpush1.bf16.msra.mxu0 0
    %87 = vmatprep.mubr.bf16.mxu0 0
    %88 = vmatmul.mubr.bf16.gmra.mrb[0].mxu0 %v53
    %v89 = vpop.f32.mrb[0].mxu0
    %v90 = vadd.f32 %v38, %v89
    %v91 = vpop.f32.mrb[0].mxu0
    %v92 = vpop.f32.mrb[0].mxu0
    %v93 = vpop.f32.mrb[0].mxu0
    %94 = vdwg.mxu0
    %v95 = vsel %vm51, %v90, 0.0
    %96 = vadd.xlane.f32.xlu0 %v95
    %v97 = vpop.xlane.xlu0 %96
    %v98 = vmul.f32 %v97, 0.03125
    %v99 = vsub.f32 %v90, %v98
    %v100 = vmul.f32 %v99, %v99
    %v101 = vsel %vm51, %v100, 0.0
    %102 = vadd.xlane.f32.xlu0 %v101
    %v103 = vpop.xlane.xlu0 %102
    %v104 = vmul.f32 %v103, 0.03125
    %v105 = vadd.f32 %v104, 1e-05
    %v106 = vrsqrt.pop %v105
    %v107 = vmul.f32 %v99, %v106
    %v108 = vlaneseq
    %v109 = vshrl.u32 %v108, 7
    %v110 = vsub.s32 1, %v109
    %v111 = vrot.slane %v34, %v110
    %v112 = vmul.f32 %v107, %v111
    %v113 = vlaneseq
    %v114 = vshrl.u32 %v113, 7
    %v115 = vsub.s32 2, %v114
    %v116 = vrot.slane %v34, %v115
    %v117 = vadd.f32 %v112, %v116
    %v118 = vmax.f32 %v117, 0.0
    %v119 = vmul.f32 %v118, %v118
    %v120 = vsel %vm51, %v119, 0.0
    %121 = vadd.xlane.f32.xlu0 %v120
    %v122 = vpop.xlane.xlu0 %121
    %v123 = vmax.f32 %v122, 1e-24
    %v124 = vrsqrt.pop %v123
    %v125 = vmul.f32 %v118, %v124
    %126 = vst.msk [vmem:[#allocation2] sm:$0xff] %vm51, %v125
    %v127 = vld [vmem:[%s1] sm:$0xff]
    %v128 = vpack.c.bf16 %v127, %v127
    %v129 = vld [vmem:[%s4] sm:$0xf]
    %v130 = vld [vmem:[%s4 + $0x4] sm:$0xf]
    %v131 = vld [vmem:[%s4 + $0x8] sm:$0xf]
    %v132 = vld [vmem:[%s4 + $0xc] sm:$0xf]
    %v133 = vld [vmem:[%s4 + $0x10] sm:$0xf]
    %v134 = vld [vmem:[%s4 + $0x14] sm:$0xf]
    %v135 = vld [vmem:[%s5] sm:$0x7]
    %v136 = vlaneseq
    %v137 = vshrl.u32 %v136, 7
    %v138 = vsub.s32 0, %v137
    %v139 = vrot.slane %v135, %v138
    %v146 = vunpack.c.l.b16 %v129
    %v147 = vunpack.c.l.b16 %v130
    %v148 = vunpack.c.l.b16 %v131
    %v149 = vunpack.c.l.b16 %v132
    %v150 = vunpack.c.l.b16 %v133
    %v151 = vunpack.c.l.b16 %v134
    %v152 = vpack.c.b16 %v147, %v146
    %v153 = vpack.c.b16 %v149, %v148
    %v154 = vpack.c.b16 %v151, %v150
    %vm158 = vcmask 392192
    %v160 = vsel %vm158, %v128, 0
    %162 = vmatprep.subr.bf16.mxu0 0
    %163 = vmatpush1.bf16.msra.mxu0 %v152
    %164 = vmatprep.subr.bf16.mxu0 0
    %165 = vmatpush1.bf16.msra.mxu0 %v153
    %166 = vmatprep.subr.bf16.mxu0 0
    %167 = vmatpush1.bf16.msra.mxu0 %v154
    %168 = vmatprep.subr.bf16.mxu0 0
    %169 = vmatpush1.bf16.msra.mxu0 0
    %170 = vmatprep.subr.bf16.mxu0 0
    %171 = vmatpush1.bf16.msra.mxu0 0
    %172 = vmatprep.subr.bf16.mxu0 0
    %173 = vmatpush1.bf16.msra.mxu0 0
    %174 = vmatprep.subr.bf16.mxu0 0
    %175 = vmatpush1.bf16.msra.mxu0 0
    %176 = vmatprep.subr.bf16.mxu0 0
    %177 = vmatpush1.bf16.msra.mxu0 0
    %178 = vmatprep.subr.bf16.mxu0 0
    %179 = vmatpush1.bf16.msra.mxu0 0
    %180 = vmatprep.subr.bf16.mxu0 0
    %181 = vmatpush1.bf16.msra.mxu0 0
    %182 = vmatprep.subr.bf16.mxu0 0
    %183 = vmatpush1.bf16.msra.mxu0 0
    %184 = vmatprep.subr.bf16.mxu0 0
    %185 = vmatpush1.bf16.msra.mxu0 0
    %186 = vmatprep.subr.bf16.mxu0 0
    %187 = vmatpush1.bf16.msra.mxu0 0
    %188 = vmatprep.subr.bf16.mxu0 0
    %189 = vmatpush1.bf16.msra.mxu0 0
    %190 = vmatprep.subr.bf16.mxu0 0
    %191 = vmatpush1.bf16.msra.mxu0 0
    %192 = vmatprep.subr.bf16.mxu0 0
    %193 = vmatpush1.bf16.msra.mxu0 0
    %194 = vmatprep.mubr.bf16.mxu0 0
    %195 = vmatmul.mubr.bf16.gmra.mrb[0].mxu0 %v160
    %v196 = vpop.f32.mrb[0].mxu0
    %v197 = vadd.f32 %v139, %v196
    %v198 = vpop.f32.mrb[0].mxu0
    %v199 = vpop.f32.mrb[0].mxu0
    %v200 = vpop.f32.mrb[0].mxu0
    %201 = vdwg.mxu0
    %v202 = vsel %vm51, %v197, 0.0
    %203 = vadd.xlane.f32.xlu0 %v202
    %v204 = vpop.xlane.xlu0 %203
    %v205 = vmul.f32 %v204, 0.03125
    %v206 = vsub.f32 %v197, %v205
    %v207 = vmul.f32 %v206, %v206
    %v208 = vsel %vm51, %v207, 0.0
    %209 = vadd.xlane.f32.xlu0 %v208
    %v210 = vpop.xlane.xlu0 %209
    %v211 = vmul.f32 %v210, 0.03125
    %v212 = vadd.f32 %v211, 1e-05
    %v213 = vrsqrt.pop %v212
    %v214 = vmul.f32 %v206, %v213
    %v215 = vlaneseq
    %v216 = vshrl.u32 %v215, 7
    %v217 = vsub.s32 1, %v216
    %v218 = vrot.slane %v135, %v217
    %v219 = vmul.f32 %v214, %v218
    %v220 = vlaneseq
    %v221 = vshrl.u32 %v220, 7
    %v222 = vsub.s32 2, %v221
    %v223 = vrot.slane %v135, %v222
    %v224 = vadd.f32 %v219, %v223
    %v225 = vmax.f32 %v224, 0.0
    %v226 = vmul.f32 %v225, %v225
    %v227 = vsel %vm51, %v226, 0.0
    %228 = vadd.xlane.f32.xlu0 %v227
    %v229 = vpop.xlane.xlu0 %228
    %v230 = vmax.f32 %v229, 1e-24
    %v231 = vrsqrt.pop %v230
    %v232 = vmul.f32 %v225, %v231
    %233 = vst.msk [vmem:[#allocation4] sm:$0xff] %vm51, %v232
    // Predicated region
    $region26: #{_forward.1} parent=1 // pred_check
      _
    $region27: #{_forward.1} parent=1 // pred_check_branch
      %235 = sbr.rel (0) target = $region29
    $region28: #{_forward.1} parent=1 // pred_region
      %s237 = ssub.s32 128, 128
      %238 = vsyncadd [#allocation3], %s237
      %s240 = sshll.u32 [#allocation2], 4
      %s241 = int_to_ptr.vmem [resolvable:$true] %s240
      %243 = dma.vmem_to_hbm [thread:$0]  %s241, 128, %s6, [#allocation3]
    $region29: #{_forward.1} parent=1 // pred_fallthru
      _
    // Predicated region
    $region30: #{_forward.1} parent=1 // pred_check
      _
    $region31: #{_forward.1} parent=1 // pred_check_branch
      %245 = sbr.rel (0) target = $region33
    $region32: #{_forward.1} parent=1 // pred_region
      %s247 = ssub.s32 128, 128
      %248 = vsyncadd [#allocation5], %s247
      %s250 = sshll.u32 [#allocation4], 4
      %s251 = int_to_ptr.vmem [resolvable:$true] %s250
      %253 = dma.vmem_to_hbm [thread:$0]  %s251, 128, %s7, [#allocation5]
    $region33: #{_forward.1} parent=1 // pred_fallthru
      _
    // Predicated region
    $region34: #{_forward.1} parent=1 // pred_check
      _
    $region35: #{_forward.1} parent=1 // pred_check_branch
      %255 = sbr.rel (0) target = $region37
    $region36: #{_forward.1} parent=1 // pred_region
      %256 = dma.done [#allocation3], 128
    $region37: #{_forward.1} parent=1 // pred_fallthru
      _
    // Predicated region
    $region38: #{_forward.1} parent=1 // pred_check
      _
    $region39: #{_forward.1} parent=1 // pred_check_branch
      %258 = sbr.rel (0) target = $region41
    $region40: #{_forward.1} parent=1 // pred_region
      %259 = dma.done [#allocation5], 128
    $region41: #{_forward.1} parent=1 // pred_fallthru
      _
    %260 = vsyncpa [#allocation3], 1
    %261 = vsyncpa [#allocation5], 1

// kernel: _forward.1
$region0: #{_forward.1}
  #allocation0 [shape = 'u32[]', space=smem, size = 0x4, offset = 0x4, fixed_abs, tag = 'smem constant byte address 0x4 - core index']
  #allocation1 [shape = 'u32[144,128]{1,0:T(1,128)}', space=vmem, size = 0x12000, scoped, tag = 'internal scratch']
  %s0 = inlined_call_operand.vmem [shape: f32[8,32], index: 0, kind: input, shape index: {}]
  %s1 = inlined_call_operand.vmem [shape: f32[8,48], index: 1, kind: input, shape index: {}]
  %s2 = inlined_call_operand.vmem [shape: bf16[32,32], index: 2, kind: input, shape index: {}]
  %s3 = inlined_call_operand.vmem [shape: f32[3,32], index: 3, kind: input, shape index: {}]
  %s4 = inlined_call_operand.vmem [shape: bf16[48,32], index: 4, kind: input, shape index: {}]
  %s5 = inlined_call_operand.vmem [shape: f32[3,32], index: 5, kind: input, shape index: {}]
  %s6 = inlined_call_operand.hbm [shape: f32[8,32], index: 6, kind: output, shape index: {0}]
  %s7 = inlined_call_operand.hbm [shape: f32[8,32], index: 7, kind: output, shape index: {1}]
  %8 = xla_tuple %s6, %s7
  %s9 = sld [smem:[#allocation0]]
  $region42: #{_forward.1} parent=0
    _
  %s11 = ssub.s32 1, %s9
  %s12 = scalar_select 0, %s11, %s9
  $region1: #{_forward.1} parent=0
    #allocation2 [shape = 'u8[4096]{0}', space=vmem, size = 0x1000, scoped, tag = 'output window, operand 0, single buffered']
    #allocation3 [shape = 's32[1]{0}', space=sflag, size = 0x4, scoped, tag = 'scoped memory for _forward.1']
    #allocation4 [shape = 'u8[4096]{0}', space=vmem, size = 0x1000, scoped, tag = 'output window, operand 1, single buffered']
    #allocation5 [shape = 's32[1]{0}', space=sflag, size = 0x4, scoped, tag = 'scoped memory for _forward.1']
    %13 = vsyncpa [#allocation3], 0
    %14 = vsyncpa [#allocation5], 0
    // Predicated region
    $region2: #{_forward.1} parent=1 // pred_check
      _
    $region3: #{_forward.1} parent=1 // pred_check_branch
      %16 = sbr.rel (0) target = $region5
    $region4: #{_forward.1} parent=1 // pred_region
      _
    $region5: #{_forward.1} parent=1 // pred_fallthru
      _
    // Predicated region
    $region6: #{_forward.1} parent=1 // pred_check
      _
    $region7: #{_forward.1} parent=1 // pred_check_branch
      %18 = sbr.rel (0) target = $region9
    $region8: #{_forward.1} parent=1 // pred_region
      _
    $region9: #{_forward.1} parent=1 // pred_fallthru
      _
    // Predicated region
    $region10: #{_forward.1} parent=1 // pred_check
      _
    $region11: #{_forward.1} parent=1 // pred_check_branch
      %20 = sbr.rel (0) target = $region13
    $region12: #{_forward.1} parent=1 // pred_region
      _
    $region13: #{_forward.1} parent=1 // pred_fallthru
      _
    // Predicated region
    $region14: #{_forward.1} parent=1 // pred_check
      _
    $region15: #{_forward.1} parent=1 // pred_check_branch
      %22 = sbr.rel (0) target = $region17
    $region16: #{_forward.1} parent=1 // pred_region
      _
    $region17: #{_forward.1} parent=1 // pred_fallthru
      _
    // Predicated region
    $region18: #{_forward.1} parent=1 // pred_check
      _
    $region19: #{_forward.1} parent=1 // pred_check_branch
      %24 = sbr.rel (0) target = $region21
    $region20: #{_forward.1} parent=1 // pred_region
      _
    $region21: #{_forward.1} parent=1 // pred_fallthru
      _
    // Predicated region
    $region22: #{_forward.1} parent=1 // pred_check
      _
    $region23: #{_forward.1} parent=1 // pred_check_branch
      %26 = sbr.rel (0) target = $region25
    $region24: #{_forward.1} parent=1 // pred_region
      _
    $region25: #{_forward.1} parent=1 // pred_fallthru
      _
    %v28 = vld [vmem:[%s0] sm:$0xff]
    %v29 = vpack.c.bf16 %v28, %v28
    %v30 = vld [vmem:[%s2] sm:$0xf]
    %v31 = vld [vmem:[%s2 + $0x4] sm:$0xf]
    %v32 = vld [vmem:[%s2 + $0x8] sm:$0xf]
    %v33 = vld [vmem:[%s2 + $0xc] sm:$0xf]
    %v34 = vld [vmem:[%s3] sm:$0x7]
    %v35 = vlaneseq
    %v36 = vshrl.u32 %v35, 7
    %v37 = vsub.s32 0, %v36
    %v38 = vrot.slane %v34, %v37
    %v43 = vunpack.c.l.b16 %v30
    %v44 = vunpack.c.l.b16 %v31
    %v45 = vunpack.c.l.b16 %v32
    %v46 = vunpack.c.l.b16 %v33
    %v47 = vpack.c.b16 %v44, %v43
    %v48 = vpack.c.b16 %v46, %v45
    %vm51 = vcmask 261120
    %v53 = vsel %vm51, %v29, 0
    %55 = vmatprep.subr.bf16.mxu0 0
    %56 = vmatpush1.bf16.msra.mxu0 %v47
    %57 = vmatprep.subr.bf16.mxu0 0
    %58 = vmatpush1.bf16.msra.mxu0 %v48
    %59 = vmatprep.subr.bf16.mxu0 0
    %60 = vmatpush1.bf16.msra.mxu0 0
    %61 = vmatprep.subr.bf16.mxu0 0
    %62 = vmatpush1.bf16.msra.mxu0 0
    %63 = vmatprep.subr.bf16.mxu0 0
    %64 = vmatpush1.bf16.msra.mxu0 0
    %65 = vmatprep.subr.bf16.mxu0 0
    %66 = vmatpush1.bf16.msra.mxu0 0
    %67 = vmatprep.subr.bf16.mxu0 0
    %68 = vmatpush1.bf16.msra.mxu0 0
    %69 = vmatprep.subr.bf16.mxu0 0
    %70 = vmatpush1.bf16.msra.mxu0 0
    %71 = vmatprep.subr.bf16.mxu0 0
    %72 = vmatpush1.bf16.msra.mxu0 0
    %73 = vmatprep.subr.bf16.mxu0 0
    %74 = vmatpush1.bf16.msra.mxu0 0
    %75 = vmatprep.subr.bf16.mxu0 0
    %76 = vmatpush1.bf16.msra.mxu0 0
    %77 = vmatprep.subr.bf16.mxu0 0
    %78 = vmatpush1.bf16.msra.mxu0 0
    %79 = vmatprep.subr.bf16.mxu0 0
    %80 = vmatpush1.bf16.msra.mxu0 0
    %81 = vmatprep.subr.bf16.mxu0 0
    %82 = vmatpush1.bf16.msra.mxu0 0
    %83 = vmatprep.subr.bf16.mxu0 0
    %84 = vmatpush1.bf16.msra.mxu0 0
    %85 = vmatprep.subr.bf16.mxu0 0
    %86 = vmatpush1.bf16.msra.mxu0 0
    %87 = vmatprep.mubr.bf16.mxu0 0
    %88 = vmatmul.mubr.bf16.gmra.mrb[0].mxu0 %v53
    %v89 = vpop.f32.mrb[0].mxu0
    %v90 = vadd.f32 %v38, %v89
    %v91 = vpop.f32.mrb[0].mxu0
    %v92 = vpop.f32.mrb[0].mxu0
    %v93 = vpop.f32.mrb[0].mxu0
    %94 = vdwg.mxu0
    %v95 = vsel %vm51, %v90, 0.0
    %96 = vadd.xlane.f32.xlu0 %v95
    %v97 = vpop.xlane.xlu0 %96
    %v98 = vmul.f32 %v97, 0.03125
    %v99 = vsub.f32 %v90, %v98
    %v100 = vmul.f32 %v99, %v99
    %v101 = vsel %vm51, %v100, 0.0
    %102 = vadd.xlane.f32.xlu0 %v101
    %v103 = vpop.xlane.xlu0 %102
    %v104 = vmul.f32 %v103, 0.03125
    %v105 = vadd.f32 %v104, 1e-05
    %v106 = vrsqrt.pop %v105
    %v107 = vmul.f32 %v99, %v106
    %v108 = vlaneseq
    %v109 = vshrl.u32 %v108, 7
    %v110 = vsub.s32 1, %v109
    %v111 = vrot.slane %v34, %v110
    %v112 = vmul.f32 %v107, %v111
    %v113 = vlaneseq
    %v114 = vshrl.u32 %v113, 7
    %v115 = vsub.s32 2, %v114
    %v116 = vrot.slane %v34, %v115
    %v117 = vadd.f32 %v112, %v116
    %v118 = vmax.f32 %v117, 0.0
    %v119 = vmul.f32 %v118, %v118
    %v120 = vsel %vm51, %v119, 0.0
    %121 = vadd.xlane.f32.xlu0 %v120
    %v122 = vpop.xlane.xlu0 %121
    %v123 = vmax.f32 %v122, 1e-24
    %v124 = vrsqrt.pop %v123
    %v125 = vmul.f32 %v118, %v124
    %126 = vst.msk [vmem:[#allocation2] sm:$0xff] %vm51, %v125
    %v127 = vld [vmem:[%s1] sm:$0xff]
    %v128 = vpack.c.bf16 %v127, %v127
    %v129 = vld [vmem:[%s4] sm:$0xf]
    %v130 = vld [vmem:[%s4 + $0x4] sm:$0xf]
    %v131 = vld [vmem:[%s4 + $0x8] sm:$0xf]
    %v132 = vld [vmem:[%s4 + $0xc] sm:$0xf]
    %v133 = vld [vmem:[%s4 + $0x10] sm:$0xf]
    %v134 = vld [vmem:[%s4 + $0x14] sm:$0xf]
    %v135 = vld [vmem:[%s5] sm:$0x7]
    %v136 = vlaneseq
    %v137 = vshrl.u32 %v136, 7
    %v138 = vsub.s32 0, %v137
    %v139 = vrot.slane %v135, %v138
    %v146 = vunpack.c.l.b16 %v129
    %v147 = vunpack.c.l.b16 %v130
    %v148 = vunpack.c.l.b16 %v131
    %v149 = vunpack.c.l.b16 %v132
    %v150 = vunpack.c.l.b16 %v133
    %v151 = vunpack.c.l.b16 %v134
    %v152 = vpack.c.b16 %v147, %v146
    %v153 = vpack.c.b16 %v149, %v148
    %v154 = vpack.c.b16 %v151, %v150
    %vm158 = vcmask 392192
    %v160 = vsel %vm158, %v128, 0
    %162 = vmatprep.subr.bf16.mxu0 0
    %163 = vmatpush1.bf16.msra.mxu0 %v152
    %164 = vmatprep.subr.bf16.mxu0 0
    %165 = vmatpush1.bf16.msra.mxu0 %v153
    %166 = vmatprep.subr.bf16.mxu0 0
    %167 = vmatpush1.bf16.msra.mxu0 %v154
    %168 = vmatprep.subr.bf16.mxu0 0
    %169 = vmatpush1.bf16.msra.mxu0 0
    %170 = vmatprep.subr.bf16.mxu0 0
    %171 = vmatpush1.bf16.msra.mxu0 0
    %172 = vmatprep.subr.bf16.mxu0 0
    %173 = vmatpush1.bf16.msra.mxu0 0
    %174 = vmatprep.subr.bf16.mxu0 0
    %175 = vmatpush1.bf16.msra.mxu0 0
    %176 = vmatprep.subr.bf16.mxu0 0
    %177 = vmatpush1.bf16.msra.mxu0 0
    %178 = vmatprep.subr.bf16.mxu0 0
    %179 = vmatpush1.bf16.msra.mxu0 0
    %180 = vmatprep.subr.bf16.mxu0 0
    %181 = vmatpush1.bf16.msra.mxu0 0
    %182 = vmatprep.subr.bf16.mxu0 0
    %183 = vmatpush1.bf16.msra.mxu0 0
    %184 = vmatprep.subr.bf16.mxu0 0
    %185 = vmatpush1.bf16.msra.mxu0 0
    %186 = vmatprep.subr.bf16.mxu0 0
    %187 = vmatpush1.bf16.msra.mxu0 0
    %188 = vmatprep.subr.bf16.mxu0 0
    %189 = vmatpush1.bf16.msra.mxu0 0
    %190 = vmatprep.subr.bf16.mxu0 0
    %191 = vmatpush1.bf16.msra.mxu0 0
    %192 = vmatprep.subr.bf16.mxu0 0
    %193 = vmatpush1.bf16.msra.mxu0 0
    %194 = vmatprep.mubr.bf16.mxu0 0
    %195 = vmatmul.mubr.bf16.gmra.mrb[0].mxu0 %v160
    %v196 = vpop.f32.mrb[0].mxu0
    %v197 = vadd.f32 %v139, %v196
    %v198 = vpop.f32.mrb[0].mxu0
    %v199 = vpop.f32.mrb[0].mxu0
    %v200 = vpop.f32.mrb[0].mxu0
    %201 = vdwg.mxu0
    %v202 = vsel %vm51, %v197, 0.0
    %203 = vadd.xlane.f32.xlu0 %v202
    %v204 = vpop.xlane.xlu0 %203
    %v205 = vmul.f32 %v204, 0.03125
    %v206 = vsub.f32 %v197, %v205
    %v207 = vmul.f32 %v206, %v206
    %v208 = vsel %vm51, %v207, 0.0
    %209 = vadd.xlane.f32.xlu0 %v208
    %v210 = vpop.xlane.xlu0 %209
    %v211 = vmul.f32 %v210, 0.03125
    %v212 = vadd.f32 %v211, 1e-05
    %v213 = vrsqrt.pop %v212
    %v214 = vmul.f32 %v206, %v213
    %v215 = vlaneseq
    %v216 = vshrl.u32 %v215, 7
    %v217 = vsub.s32 1, %v216
    %v218 = vrot.slane %v135, %v217
    %v219 = vmul.f32 %v214, %v218
    %v220 = vlaneseq
    %v221 = vshrl.u32 %v220, 7
    %v222 = vsub.s32 2, %v221
    %v223 = vrot.slane %v135, %v222
    %v224 = vadd.f32 %v219, %v223
    %v225 = vmax.f32 %v224, 0.0
    %v226 = vmul.f32 %v225, %v225
    %v227 = vsel %vm51, %v226, 0.0
    %228 = vadd.xlane.f32.xlu0 %v227
    %v229 = vpop.xlane.xlu0 %228
    %v230 = vmax.f32 %v229, 1e-24
    %v231 = vrsqrt.pop %v230
    %v232 = vmul.f32 %v225, %v231
    %233 = vst.msk [vmem:[#allocation4] sm:$0xff] %vm51, %v232
    // Predicated region
    $region26: #{_forward.1} parent=1 // pred_check
      _
    $region27: #{_forward.1} parent=1 // pred_check_branch
      %235 = sbr.rel (0) target = $region29
    $region28: #{_forward.1} parent=1 // pred_region
      %s237 = ssub.s32 128, 128
      %238 = vsyncadd [#allocation3], %s237
      %s240 = sshll.u32 [#allocation2], 4
      %s241 = int_to_ptr.vmem [resolvable:$true] %s240
      %243 = dma.vmem_to_hbm [thread:$0]  %s241, 128, %s6, [#allocation3]
    $region29: #{_forward.1} parent=1 // pred_fallthru
      _
    // Predicated region
    $region30: #{_forward.1} parent=1 // pred_check
      _
    $region31: #{_forward.1} parent=1 // pred_check_branch
      %245 = sbr.rel (0) target = $region33
    $region32: #{_forward.1} parent=1 // pred_region
      %s247 = ssub.s32 128, 128
      %248 = vsyncadd [#allocation5], %s247
      %s250 = sshll.u32 [#allocation4], 4
      %s251 = int_to_ptr.vmem [resolvable:$true] %s250
      %253 = dma.vmem_to_hbm [thread:$0]  %s251, 128, %s7, [#allocation5]
    $region33: #{_forward.1} parent=1 // pred_fallthru
      _
    // Predicated region
    $region34: #{_forward.1} parent=1 // pred_check
      _
    $region35: #{_forward.1} parent=1 // pred_check_branch
      %255 = sbr.rel (0) target = $region37
    $region36: #{_forward.1} parent=1 // pred_region
      %256 = dma.done [#allocation3], 128
    $region37: #{_forward.1} parent=1 // pred_fallthru
      _
    // Predicated region
    $region38: #{_forward.1} parent=1 // pred_check
      _
    $region39: #{_forward.1} parent=1 // pred_check_branch
      %258 = sbr.rel (0) target = $region41
    $region40: #{_forward.1} parent=1 // pred_region
      %259 = dma.done [#allocation5], 128
    $region41: #{_forward.1} parent=1 // pred_fallthru
      _
    %260 = vsyncpa [#allocation3], 1
    %261 = vsyncpa [#allocation5], 1

</llo_original>
